<compile_context>
chip_gen: v5e
topology: v5e:2x2
jax: 0.10.0
libtpu: 0.0.40
codegen_flags: <defaults>
</compile_context>

<pallas_src>
import jax
import jax.numpy as jnp
from jax.experimental import pallas as pl
from jax.experimental.pallas import tpu as pltpu


def _round_up(x, m):
    return ((x + m - 1) // m) * m


def _chip_info():
    """(VMEM budget in bytes, megacore?) for the attached TPU generation."""
    try:
        kind = jax.devices()[0].device_kind.lower()
    except Exception:
        kind = ""
    if "v7" in kind:
        return 32 << 20, True          # 64 MiB physical VMEM, 2 TensorCores
    if "v6" in kind:
        return 96 << 20, False         # 128 MiB physical, single TC
    if "v5" in kind:
        # v5e ("lite") is single-core; v5p is megacore.  Both have 128 MiB VMEM.
        return 96 << 20, ("lite" not in kind and "v5e" not in kind)
    if "v4" in kind:
        return 96 << 20, True
    return 32 << 20, True              # unknown / interpret: conservative


def _choose_rows(n_rows, real_row_bytes, vmem_row_bytes, vmem_budget, megacore, granule):
    """Rows per grid step: >= ~8 MiB of REAL HBM bytes per step (amortise the
    ~0.35us step overhead), within the VMEM budget (double-buffered), never
    past the array, and split >=2 ways on megacore chips when there is work."""
    rows = _round_up(max(1, (8 << 20) // max(real_row_bytes, 1)), granule)
    cap = ((vmem_budget - (2 << 20)) // (2 * max(vmem_row_bytes, 1)))
    cap = max(granule, (cap // granule) * granule)
    rows = min(rows, cap)
    rows = min(rows, _round_up(n_rows, granule))
    if megacore and n_rows >= 2 * granule:
        rows = min(rows, _round_up(pl.cdiv(n_rows, 2), granule))
    return max(rows, granule)


def _gemv_sigmoid_kernel(x_ref, w_ref, b_ref, o_ref):
    # x_ref: (TM, D) VMEM   w_ref: (1, D) VMEM   b_ref: (1,) SMEM   o_ref: (1, TM) VMEM
    x = x_ref[...].astype(jnp.float32)
    w = w_ref[...].astype(jnp.float32)
    # Width-1 GEMV: VPU broadcast-multiply + cross-lane reduce (XLU).  If the
    # XLU ever becomes the binding slot, jnp.dot(x, w.T) on the idle MXU is the
    # alternative.  Lane-dense (1, TM) output row.
    z = (jnp.sum(x * w, axis=-1) + b_ref[0])[None, :]                 # (1, TM)
    # Exact sigmoid (approx reciprocal previously broke numerical parity).
    o_ref[...] = (1.0 / (1.0 + jnp.exp(-z))).astype(o_ref.dtype)


def _packed_gemv_sigmoid_kernel(xp_ref, wblk_ref, b_ref, o_ref):
    # xp_ref: (TMP, 128) lane-packed rows (each 128-lane row holds P=128/D batch rows)
    # wblk_ref: (128, P) block-diagonal weight   o_ref: (TMP, P)
    # out[i, j] = <x[i*P + j, :], w>; the segmented reduction runs on the idle MXU.
    z = jnp.dot(xp_ref[...].astype(jnp.float32), wblk_ref[...],
                preferred_element_type=jnp.float32) + b_ref[0]
    o_ref[...] = (1.0 / (1.0 + jnp.exp(-z))).astype(o_ref.dtype)


@jax.jit
def liner_model_forward(x, w, b):
    """sigmoid(x @ w + b).flatten() computed in a Pallas TPU kernel.

    x: (B, D); w: (D,), (D, 1) or (1, D); b: scalar or (1,)  ->  (B,) float32.
    """
    B, D = x.shape
    w_flat = jnp.asarray(w, jnp.float32).reshape(D)
    b_vec = jnp.asarray(b, jnp.float32).reshape(1)
    vmem_budget, megacore = _chip_info()
    itemsize = x.dtype.itemsize  # bf16 inputs stream at half the HBM bytes

    use_packed = (D < 128) and (128 % D == 0) and ((B * D) % 128 == 0)

    if use_packed:
        # ---- lane-packed path: full lane utilisation for small D ----
        P = 128 // D
        n_rows = (B * D) // 128
        xp = x.reshape(n_rows, 128)                       # contiguous re-view of x
        lane = jnp.arange(128)
        wblk = jnp.where((lane[:, None] // D) == jnp.arange(P)[None, :],
                         jnp.tile(w_flat, P)[:, None], 0.0).astype(jnp.float32)

        tmp = _choose_rows(n_rows, 128 * itemsize, 128 * 4,
                           vmem_budget, megacore, granule=8)
        grid = pl.cdiv(n_rows, tmp)
        vmem_needed = 2 * (tmp * 128 * itemsize + tmp * 128 * 4) + 128 * 128 * 4 + (1 << 20)
        vmem_limit = int(min(max(vmem_needed, 16 << 20), vmem_budget))

        out = pl.pallas_call(
            _packed_gemv_sigmoid_kernel,
            out_shape=jax.ShapeDtypeStruct((n_rows, P), jnp.float32),
            grid=(grid,),
            in_specs=[
                pl.BlockSpec((tmp, 128), lambda i: (i, 0)),            # packed x tile
                pl.BlockSpec((128, P), lambda i: (0, 0)),              # block-diag weight
                pl.BlockSpec(memory_space=pltpu.MemorySpace.SMEM),     # bias scalar
            ],
            out_specs=pl.BlockSpec((tmp, P), lambda i: (i, 0)),
            compiler_params=pltpu.CompilerParams(
                dimension_semantics=("parallel",),
                vmem_limit_bytes=vmem_limit,
            ),
            cost_estimate=pl.CostEstimate(
                flops=2 * n_rows * 128 * P,
                transcendentals=n_rows * P,
                bytes_accessed=n_rows * 128 * itemsize + n_rows * P * 4 + 128 * P * 4,
            ),
        )(xp, wblk, b_vec)
        # Exactly B elements, already in batch order.
        return out.reshape(-1)

    # ---- general path ----
    d_pad = _round_up(max(D, 128), 128)
    tm = _choose_rows(B, D * itemsize, d_pad * 4, vmem_budget, megacore, granule=128)
    grid = pl.cdiv(B, tm)
    vmem_needed = 2 * (tm * d_pad * itemsize + 8 * tm * 4) + 8 * d_pad * 4 + (1 << 20)
    vmem_limit = int(min(max(vmem_needed, 16 << 20), vmem_budget))

    out = pl.pallas_call(
        _gemv_sigmoid_kernel,
        out_shape=jax.ShapeDtypeStruct((grid, tm), jnp.float32),
        grid=(grid,),
        in_specs=[
            pl.BlockSpec((tm, D), lambda i: (i, 0)),                   # x batch tile
            pl.BlockSpec((1, D), lambda i: (0, 0)),                    # lane-dense weight row
            pl.BlockSpec(memory_space=pltpu.MemorySpace.SMEM),         # bias scalar
        ],
        out_specs=pl.BlockSpec((1, tm), lambda i: (i, 0)),             # lane-dense output row
        compiler_params=pltpu.CompilerParams(
            dimension_semantics=("parallel",),
            vmem_limit_bytes=vmem_limit,
        ),
        cost_estimate=pl.CostEstimate(
            flops=2 * B * D,
            transcendentals=B,
            bytes_accessed=B * D * itemsize + B * 4 + D * 4,
        ),
    )(x, w_flat.reshape(1, D), b_vec)
    # Rows past B in the tail block are undefined reads whose outputs are
    # discarded here; valid only because rows are computed independently.
    return out.reshape(-1)[:B]


if __name__ == "__main__":
    # LINER_MODEL(dim): Linear(dim, 1) + Sigmoid, params initialised to 0.
    B, D = 300, 32                      # B deliberately not a multiple of any tile
    key = jax.random.PRNGKey(0)
    kx, kw, kb = jax.random.split(key, 3)
    x = jax.random.normal(kx, (B, D), dtype=jnp.float32)

    # Exactly nn.init.constant_(..., 0): output must be 0.5 everywhere.
    w = jnp.zeros((D,), jnp.float32)
    b = jnp.zeros((), jnp.float32)
    y = jax.block_until_ready(liner_model_forward(x, w, b))
    assert y.shape == (B,)
    ref = jax.nn.sigmoid(x @ w + b)
    assert jnp.allclose(y, ref, atol=1e-3), float(jnp.max(jnp.abs(y - ref)))

    # Non-trivial parameters (lane-packed path: D=32, B*D % 128 == 0).
    w2 = jax.random.normal(kw, (D,), jnp.float32) * 0.1
    b2 = jax.random.normal(kb, (), jnp.float32) * 0.1
    y2 = jax.block_until_ready(liner_model_forward(x, w2, b2))
    ref2 = jax.nn.sigmoid(x @ w2 + b2)
    assert jnp.allclose(y2, ref2, atol=1e-3), float(jnp.max(jnp.abs(y2 - ref2)))

    # General (unpacked) path: ragged batch, D not dividing 128.
    B3, D3 = 173, 48
    x3 = jax.random.normal(kx, (B3, D3), dtype=jnp.float32)
    w3 = jax.random.normal(kw, (D3,), jnp.float32) * 0.1
    b3 = jnp.float32(0.05)
    y3 = jax.block_until_ready(liner_model_forward(x3, w3, b3))
    ref3 = jax.nn.sigmoid(x3 @ w3 + b3)
    assert y3.shape == (B3,)
    assert jnp.allclose(y3, ref3, atol=1e-3), float(jnp.max(jnp.abs(y3 - ref3)))

    print("KERNEL_OK")
</pallas_src>

<mosaic_0001>
module attributes {stable_mosaic.version = 11 : i64} {
  func.func @_packed_gemv_sigmoid_kernel(%arg0: i32, %arg1: memref<40x128xf32, #tpu.memory_space<vmem>>, %arg2: memref<128x4xf32, #tpu.memory_space<vmem>>, %arg3: memref<1xf32, #tpu.memory_space<smem>>, %arg4: memref<40x4xf32, #tpu.memory_space<vmem>>) attributes {dimension_semantics = [#tpu.dimension_semantics<parallel>], iteration_bounds = array<i64: 2>, scalar_prefetch = 0 : i64, scratch_operands = 0 : i64, tpu.core_type = #tpu.core_type<tc>, window_params = [{transform_indices = @transform_0, window_bounds = array<i64: 40, 128>}, {pipeline_mode = #tpu.pipeline_mode<synchronous>, transform_indices = @transform_1, window_bounds = array<i64: 128, 4>}, {transform_indices = @transform_2, window_bounds = array<i64: 1>}, {transform_indices = @transform_3, window_bounds = array<i64: 40, 4>}]} {
    %c0 = arith.constant 0 : index
    %c0_0 = arith.constant 0 : index
    %0 = vector.load %arg1[%c0, %c0_0] : memref<40x128xf32, #tpu.memory_space<vmem>>, vector<40x128xf32>
    %c0_1 = arith.constant 0 : index
    %c0_2 = arith.constant 0 : index
    %1 = vector.load %arg2[%c0_1, %c0_2] : memref<128x4xf32, #tpu.memory_space<vmem>>, vector<128x4xf32>
    %cst = arith.constant dense<0.000000e+00> : vector<40x4xf32>
    %2 = tpu.matmul %0, %1, %cst {dimension_numbers = #tpu.dot_dimension_numbers<[1], [0], [0], [1], [0, 0, 1, 1], [], []>} : vector<40x128xf32>, vector<128x4xf32>, vector<40x4xf32> -> vector<40x4xf32>
    %c0_3 = arith.constant 0 : index
    %3 = memref.load %arg3[%c0_3] : memref<1xf32, #tpu.memory_space<smem>>
    %4 = vector.broadcast %3 : f32 to vector<40x4xf32>
    %5 = arith.addf %2, %4 : vector<40x4xf32>
    %cst_4 = arith.constant 0.000000e+00 : f32
    %6 = vector.broadcast %cst_4 : f32 to vector<40x4xf32>
    %7 = arith.subf %6, %5 : vector<40x4xf32>
    %8 = math.exp %7 : vector<40x4xf32>
    %cst_5 = arith.constant 1.000000e+00 : f32
    %9 = vector.broadcast %cst_5 : f32 to vector<40x4xf32>
    %10 = arith.addf %9, %8 : vector<40x4xf32>
    %cst_6 = arith.constant 1.000000e+00 : f32
    %11 = vector.broadcast %cst_6 : f32 to vector<40x4xf32>
    %12 = arith.divf %11, %10 : vector<40x4xf32>
    %c0_7 = arith.constant 0 : index
    %c0_8 = arith.constant 0 : index
    %13 = vector.load %arg4[%c0_7, %c0_8] : memref<40x4xf32, #tpu.memory_space<vmem>>, vector<40x4xf32>
    tpu.vector_store %arg4[%c0_7, %c0_8], %12 {strides = array<i32>} : memref<40x4xf32, #tpu.memory_space<vmem>>, vector<40x4xf32>,
    return
  }
  func.func @transform_0(%arg0: i32) -> (i32, i32) {
    %c0_i32 = arith.constant 0 : i32
    %c0_i32_0 = arith.constant 0 : i32
    return %arg0, %c0_i32 : i32, i32
  }
  func.func @transform_1(%arg0: i32) -> (i32, i32) {
    %c0_i32 = arith.constant 0 : i32
    %c0_i32_0 = arith.constant 0 : i32
    %c0_i32_1 = arith.constant 0 : i32
    return %c0_i32, %c0_i32_0 : i32, i32
  }
  func.func @transform_2(%arg0: i32) -> i32 {
    %c0_i32 = arith.constant 0 : i32
    %c0_i32_0 = arith.constant 0 : i32
    return %c0_i32 : i32
  }
  func.func @transform_3(%arg0: i32) -> (i32, i32) {
    %c0_i32 = arith.constant 0 : i32
    %c0_i32_0 = arith.constant 0 : i32
    return %arg0, %c0_i32 : i32, i32
  }
}

</mosaic_0001>

<llo_original>
// kernel: tile.8
$region0: #{tile.8}
  #allocation0 [shape = 's32[1]{0}', space=sflag, size = 0x4, scoped, tag = 'scoped memory for tile.8']
  %s0 = inlined_call_operand.vmem [shape: f32[32], index: 0, kind: input, shape index: {}]
  %s1 = inlined_call_operand.vmem [shape: f32[4,32], index: 1, kind: output, shape index: {}]
  // Predicated region
  $region2: #{tile.8} parent=0 // pred_check
    _
  $region3: #{tile.8} parent=0 // pred_check_branch
    %3 = sbr.rel (0) target = $region5
  $region4: #{tile.8} parent=0 // pred_region
    _
  $region5: #{tile.8} parent=0 // pred_fallthru
    _
  %v4 = vld [vmem:[%s0] ss:$0 sm:$0xff]
  %5 = vst [vmem:[%s1] sm:$0xf] %v4

// kernel: liner_model_forward.1
$region0: #{liner_model_forward.1}
  #allocation0 [shape = 'u32[]', space=smem, size = 0x4, offset = 0x4, fixed_abs, tag = 'smem constant byte address 0x4 - core index']
  #allocation1 [shape = 'u32[72,128]{1,0:T(1,128)}', space=vmem, size = 0x9000, scoped, tag = 'internal scratch']
  #allocation2 [shape = 'f32[1]{0:T(128)S(6)}', space=smem, size = 0x200, scoped, tag = 'scoped memory for liner_model_forward.1']
  %s0 = inlined_call_operand.vmem [shape: f32[75,128], index: 0, kind: input, shape index: {}]
  %s1 = inlined_call_operand.vmem [shape: f32[128,4], index: 1, kind: input, shape index: {}]
  %s2 = inlined_call_operand.<no memory space> [shape: f32[1], index: 2, kind: input, shape index: {}]
  %s3 = inlined_call_operand.vmem [shape: f32[75,4], index: 3, kind: output, shape index: {}]
  %s4 = sld [smem:[#allocation0]]
  $region45: #{liner_model_forward.1} parent=0
    _
  %s6 = ssub.s32 1, %s4
  %s7 = scalar_select 0, %s6, %s4
  %8 = sst [smem:[#allocation2]] %s2
  loop: start=0, step=1, limit=4
  $region2: #{liner_model_forward.1} parent=0 // loop_pre_header
    _
  $region3: #{liner_model_forward.1} parent=0 // loop_header
    %s10 = sphi 0, %s14
    %p11 = scmp.ge.s32.totalorder %s10, 4
    %s20 = sphi 0, %s22
    %s23 = sphi 0, %s20
    %s24 = sphi 0, %s23
    %s40 = sphi 0, %s24
    %s44 = sphi 0, %s44
    %s46 = sphi 0, %s44
    %s47 = sphi 0, %s46
    %s61 = sphi 0, %s47
    %s65 = sphi 0, %s65
    %s67 = sphi 0, %s65
    %s68 = sphi 0, %s67
    %s82 = sphi 0, %s68
    %s88 = sphi 0, %s90
    %s91 = sphi 0, %s88
    %s92 = sphi 0, %s91
    %s108 = sphi 0, %s92
  $region4: #{liner_model_forward.1} parent=0 // loop_header_branch
    %13 = sbr.rel (%p11) target = $region8
  $region5: #{liner_model_forward.1} parent=0 // loop_body
    %s15 = ssub.s32 %s10, 1
    %s16 = ssub.s32 %s10, 2
    %s17 = sadd.s32 %s10, 1
    %s18 = ssub.s32 %s10, %s17
    %p19 = scmp.eq.s32.totalorder %s18, 0
    %s21 = sadd.s32 %s20, 1
    %s22 = scalar_select %p19, %s20, %s21
    %p25 = pneg %p19
    %p26 = scmp.eq.s32.totalorder %s10, 1
    %p27 = por %p25, %p26
    %p28 = scmp.ne.s32.totalorder %s20, %s23
    %p29 = scmp.eq.s32.totalorder %s10, 0
    %p30 = por %p28, %p29
    %p31 = scmp.ne.s32.totalorder %s20, %s23
    %p32 = scmp.eq.s32.totalorder %s15, 1
    %p33 = por %p31, %p32
    %p34 = scmp.ne.s32.totalorder %s23, %s24
    %p35 = scmp.eq.s32.totalorder %s15, 0
    %p36 = por %p34, %p35
    %p37 = scmp.ne.s32.totalorder %s23, %s24
    %p38 = scmp.eq.s32.totalorder %s16, 1
    %p39 = por %p37, %p38
    %p41 = scmp.ne.s32.totalorder %s24, %s40
    %p42 = scmp.eq.s32.totalorder %s16, 0
    %p43 = por %p41, %p42
    %s45 = sadd.s32 %s44, 1
    %p48 = scmp.eq.s32.totalorder %s10, 1
    %p49 = scmp.ne.s32.totalorder %s44, %s46
    %p50 = scmp.eq.s32.totalorder %s10, 0
    %p51 = por %p49, %p50
    %p52 = scmp.ne.s32.totalorder %s44, %s46
    %p53 = scmp.eq.s32.totalorder %s15, 1
    %p54 = por %p52, %p53
    %p55 = scmp.ne.s32.totalorder %s46, %s47
    %p56 = scmp.eq.s32.totalorder %s15, 0
    %p57 = por %p55, %p56
    %p58 = scmp.ne.s32.totalorder %s46, %s47
    %p59 = scmp.eq.s32.totalorder %s16, 1
    %p60 = por %p58, %p59
    %p62 = scmp.ne.s32.totalorder %s47, %s61
    %p63 = scmp.eq.s32.totalorder %s16, 0
    %p64 = por %p62, %p63
    %s66 = sadd.s32 %s65, 1
    %p69 = scmp.eq.s32.totalorder %s10, 1
    %p70 = scmp.ne.s32.totalorder %s65, %s67
    %p71 = scmp.eq.s32.totalorder %s10, 0
    %p72 = por %p70, %p71
    %p73 = scmp.ne.s32.totalorder %s65, %s67
    %p74 = scmp.eq.s32.totalorder %s15, 1
    %p75 = por %p73, %p74
    %p76 = scmp.ne.s32.totalorder %s67, %s68
    %p77 = scmp.eq.s32.totalorder %s15, 0
    %p78 = por %p76, %p77
    %p79 = scmp.ne.s32.totalorder %s67, %s68
    %p80 = scmp.eq.s32.totalorder %s16, 1
    %p81 = por %p79, %p80
    %p83 = scmp.ne.s32.totalorder %s68, %s82
    %p84 = scmp.eq.s32.totalorder %s16, 0
    %p85 = por %p83, %p84
    %s86 = ssub.s32 %s10, %s17
    %p87 = scmp.eq.s32.totalorder %s86, 0
    %s89 = sadd.s32 %s88, 1
    %s90 = scalar_select %p87, %s88, %s89
    %p93 = pneg %p87
    %p94 = scmp.eq.s32.totalorder %s10, 1
    %p95 = por %p93, %p94
    %p96 = scmp.ne.s32.totalorder %s88, %s91
    %p97 = scmp.eq.s32.totalorder %s10, 0
    %p98 = por %p96, %p97
    %p99 = scmp.ne.s32.totalorder %s88, %s91
    %p100 = scmp.eq.s32.totalorder %s15, 1
    %p101 = por %p99, %p100
    %p102 = scmp.ne.s32.totalorder %s91, %s92
    %p103 = scmp.eq.s32.totalorder %s15, 0
    %p104 = por %p102, %p103
    %p105 = scmp.ne.s32.totalorder %s91, %s92
    %p106 = scmp.eq.s32.totalorder %s16, 1
    %p107 = por %p105, %p106
    %p109 = scmp.ne.s32.totalorder %s92, %s108
    %p110 = scmp.eq.s32.totalorder %s16, 0
    %p111 = por %p109, %p110
    %p112 = scmp.le.s32.totalorder 1, %s10
    %p113 = scmp.lt.s32.totalorder %s10, 3
    %p114 = pnand %p112, %p113
    %p115 = pneg %p114
    // Predicated region
    $region9: #{liner_model_forward.1} parent=5 // pred_check
      _
    $region10: #{liner_model_forward.1} parent=5 // pred_check_branch
      %117 = sbr.rel (%p114) target = $region12
    $region11: #{liner_model_forward.1} parent=5 // pred_region
      %s118 = ssub.s32 %s10, 1
      // Predicated region
      $region13: #{liner_model_forward.1} parent=11 // pred_check
        %p119 = pneg %p57
      $region14: #{liner_model_forward.1} parent=11 // pred_check_branch
        %121 = sbr.rel (%p119) target = $region16
      $region15: #{liner_model_forward.1} parent=11 // pred_region
        _
      $region16: #{liner_model_forward.1} parent=11 // pred_fallthru
        _
      // Predicated region
      $region17: #{liner_model_forward.1} parent=11 // pred_check
        %p122 = pneg %p78
      $region18: #{liner_model_forward.1} parent=11 // pred_check_branch
        %124 = sbr.rel (%p122) target = $region20
      $region19: #{liner_model_forward.1} parent=11 // pred_region
        _
      $region20: #{liner_model_forward.1} parent=11 // pred_fallthru
        _
    $region12: #{liner_model_forward.1} parent=5 // pred_fallthru
      _
    %p125 = scmp.lt.s32.totalorder %s10, 2
    // Predicated region
    $region21: #{liner_model_forward.1} parent=5 // pred_check
      %p126 = pneg %p125
    $region22: #{liner_model_forward.1} parent=5 // pred_check_branch
      %128 = sbr.rel (%p126) target = $region24
    $region23: #{liner_model_forward.1} parent=5 // pred_region
      // Predicated region
      $region25: #{liner_model_forward.1} parent=23 // pred_check
        %p129 = pneg %p30
      $region26: #{liner_model_forward.1} parent=23 // pred_check_branch
        %131 = sbr.rel (%p129) target = $region28
      $region27: #{liner_model_forward.1} parent=23 // pred_region
        %s132 = smul.u32 5, %s10
        %p133 = scmp.lt.s32.totalorder %s132, 9
        %s134 = scalar_select %p133, %s132, 9
        %s135 = smul.addr %s134, 8
        %s136 = scalar_lea.vmem %s0, %s135
        %s137 = smul.u32 5, %s10
      $region28: #{liner_model_forward.1} parent=23 // pred_fallthru
        _
    $region24: #{liner_model_forward.1} parent=5 // pred_fallthru
      _
    %p138 = scmp.le.s32.totalorder 1, %s10
    %p139 = scmp.lt.s32.totalorder %s10, 3
    %p140 = pnand %p138, %p139
    %p141 = pneg %p140
    // Predicated region
    $region29: #{liner_model_forward.1} parent=5 // pred_check
      _
    $region30: #{liner_model_forward.1} parent=5 // pred_check_branch
      %143 = sbr.rel (%p140) target = $region32
    $region31: #{liner_model_forward.1} parent=5 // pred_region
      %s144 = ssub.s32 %s10, 1
      %s145 = smul.u32 5, %s15
      %p146 = scmp.lt.s32.totalorder %s145, 9
      %s147 = scalar_select %p146, %s145, 9
      %s148 = smul.addr %s147, 8
      %s149 = scalar_lea.vmem %s0, %s148
      %p150 = pneg %p36
      %p151 = pneg %p33
      %p152 = pneg %p57
      %p153 = pneg %p54
      %p154 = pneg %p78
      %p155 = pneg %p75
      %p156 = pneg %p104
      %p157 = pneg %p101
      %s158 = smul.u32 5, %s15
      %p159 = scmp.lt.s32.totalorder %s158, 9
      %s160 = scalar_select %p159, %s158, 9
      %s161 = smul.addr %s160, 8
      %s162 = scalar_lea.vmem %s3, %s161
      %s163 = smul.u32 5, %s15
      %p164 = scmp.lt.s32.totalorder %s163, 9
      %s165 = scalar_select %p164, %s163, 9
      %s166 = smul.addr %s165, 8
      %s167 = scalar_lea.vmem %s0, %s166
      %s168 = smul.u32 5, %s15
      %s169 = smul.u32 5, %s15
      %p170 = scmp.lt.s32.totalorder %s169, 9
      %s171 = scalar_select %p170, %s169, 9
      %s172 = smul.addr %s171, 8
      %s173 = scalar_lea.vmem %s3, %s172
      %s174 = smul.u32 5, %s15
      %v175 = vld [vmem:[%s167] sm:$0xff]
      %v176 = vld [vmem:[%s167 + $0x8] sm:$0xff]
      %v177 = vld [vmem:[%s167 + $0x10] sm:$0xff]
      %v178 = vld [vmem:[%s167 + $0x18] sm:$0xff]
      %v179 = vld [vmem:[%s167 + $0x20] sm:$0xff]
      %v180 = vld [vmem:[%s1] sm:$0xff]
      %v181 = vld [vmem:[%s1 + $0x8] sm:$0xff]
      %v182 = vld [vmem:[%s1 + $0x10] sm:$0xff]
      %v183 = vld [vmem:[%s1 + $0x18] sm:$0xff]
      %v184 = vld [vmem:[%s1 + $0x20] sm:$0xff]
      %v185 = vld [vmem:[%s1 + $0x28] sm:$0xff]
      %v186 = vld [vmem:[%s1 + $0x30] sm:$0xff]
      %v187 = vld [vmem:[%s1 + $0x38] sm:$0xff]
      %v188 = vld [vmem:[%s1 + $0x40] sm:$0xff]
      %v189 = vld [vmem:[%s1 + $0x48] sm:$0xff]
      %v190 = vld [vmem:[%s1 + $0x50] sm:$0xff]
      %v191 = vld [vmem:[%s1 + $0x58] sm:$0xff]
      %v192 = vld [vmem:[%s1 + $0x60] sm:$0xff]
      %v193 = vld [vmem:[%s1 + $0x68] sm:$0xff]
      %v194 = vld [vmem:[%s1 + $0x70] sm:$0xff]
      %v195 = vld [vmem:[%s1 + $0x78] sm:$0xff]
      %s196 = sld [smem:[#allocation2]]
      %v197 = vstv %s196
      %198 = vmatpush.msra.mxu0 %v195
      %199 = vmatpush.msra.mxu0 %v194
      %200 = vmatpush.msra.mxu0 %v193
      %201 = vmatpush.msra.mxu0 %v192
      %202 = vmatpush.msra.mxu0 %v191
      %203 = vmatpush.msra.mxu0 %v190
      %204 = vmatpush.msra.mxu0 %v189
      %205 = vmatpush.msra.mxu0 %v188
      %206 = vmatpush.msra.mxu0 %v187
      %207 = vmatpush.msra.mxu0 %v186
      %208 = vmatpush.msra.mxu0 %v185
      %209 = vmatpush.msra.mxu0 %v184
      %210 = vmatpush.msra.mxu0 %v183
      %211 = vmatpush.msra.mxu0 %v182
      %212 = vmatpush.msra.mxu0 %v181
      %213 = vmatpush.msra.mxu0 %v180
      %214 = vmatmul.f32.gmra.mxu0 %v175
      %v215 = vpop.f32.mrf.mxu0
      %v216 = vadd.f32 %v197, %v215
      %217 = vmatmul.f32.gmra.mxu0 %v176
      %v218 = vpop.f32.mrf.mxu0
      %v219 = vadd.f32 %v197, %v218
      %220 = vmatmul.f32.gmra.mxu0 %v177
      %v221 = vpop.f32.mrf.mxu0
      %v222 = vadd.f32 %v197, %v221
      %223 = vmatmul.f32.gmra.mxu0 %v178
      %v224 = vpop.f32.mrf.mxu0
      %v225 = vadd.f32 %v197, %v224
      %226 = vmatmul.f32.gmra.mxu0 %v179
      %v227 = vpop.f32.mrf.mxu0
      %v228 = vadd.f32 %v197, %v227
      %229 = vdwg.mxu0
      %v230 = vsub.f32 0.0, %v216
      %v231 = vsub.f32 0.0, %v219
      %v232 = vsub.f32 0.0, %v222
      %v233 = vsub.f32 0.0, %v225
      %v234 = vsub.f32 0.0, %v228
      %v235 = vmul.f32 %v230, 1.442695
      %v236 = vpow.pop %v235
      %v237 = vmul.f32 %v231, 1.442695
      %v238 = vpow.pop %v237
      %v239 = vmul.f32 %v232, 1.442695
      %v240 = vpow.pop %v239
      %v241 = vmul.f32 %v233, 1.442695
      %v242 = vpow.pop %v241
      %v243 = vmul.f32 %v234, 1.442695
      %v244 = vpow.pop %v243
      %v245 = vadd.f32 %v236, 1.0
      %v246 = vadd.f32 %v238, 1.0
      %v247 = vadd.f32 %v240, 1.0
      %v248 = vadd.f32 %v242, 1.0
      %v249 = vadd.f32 %v244, 1.0
      %v250 = vrcp.pop %v245
      %v251 = vmul.f32 %v245, %v250
      %v252 = vsub.f32 1.0, %v251
      %v253 = vmul.f32 %v250, %v252
      %v254 = vadd.f32 %v250, %v253
      %vm255 = vweird.f32 %v245
      %vm256 = vweird.f32 %v250
      %vm257 = vmor %vm255, %vm256
      %v258 = vsel %vm257, %v250, %v254
      %v259 = vand.u32 2147483647, %v245
      %vm260 = vcmp.eq.f32.partialorder %v259, 8.507059e+37
      %v261 = vand.u32 %v245, 2147483648
      %v262 = vor.u32 1.1754944e-38, %v261
      %v263 = vsel %vm260, %v262, %v258
      %v264 = vmul.f32 1.0, %v263
      %v265 = vrcp.pop %v246
      %v266 = vmul.f32 %v246, %v265
      %v267 = vsub.f32 1.0, %v266
      %v268 = vmul.f32 %v265, %v267
      %v269 = vadd.f32 %v265, %v268
      %vm270 = vweird.f32 %v246
      %vm271 = vweird.f32 %v265
      %vm272 = vmor %vm270, %vm271
      %v273 = vsel %vm272, %v265, %v269
      %v274 = vand.u32 2147483647, %v246
      %vm275 = vcmp.eq.f32.partialorder %v274, 8.507059e+37
      %v276 = vand.u32 %v246, 2147483648
      %v277 = vor.u32 1.1754944e-38, %v276
      %v278 = vsel %vm275, %v277, %v273
      %v279 = vmul.f32 1.0, %v278
      %v280 = vrcp.pop %v247
      %v281 = vmul.f32 %v247, %v280
      %v282 = vsub.f32 1.0, %v281
      %v283 = vmul.f32 %v280, %v282
      %v284 = vadd.f32 %v280, %v283
      %vm285 = vweird.f32 %v247
      %vm286 = vweird.f32 %v280
      %vm287 = vmor %vm285, %vm286
      %v288 = vsel %vm287, %v280, %v284
      %v289 = vand.u32 2147483647, %v247
      %vm290 = vcmp.eq.f32.partialorder %v289, 8.507059e+37
      %v291 = vand.u32 %v247, 2147483648
      %v292 = vor.u32 1.1754944e-38, %v291
      %v293 = vsel %vm290, %v292, %v288
      %v294 = vmul.f32 1.0, %v293
      %v295 = vrcp.pop %v248
      %v296 = vmul.f32 %v248, %v295
      %v297 = vsub.f32 1.0, %v296
      %v298 = vmul.f32 %v295, %v297
      %v299 = vadd.f32 %v295, %v298
      %vm300 = vweird.f32 %v248
      %vm301 = vweird.f32 %v295
      %vm302 = vmor %vm300, %vm301
      %v303 = vsel %vm302, %v295, %v299
      %v304 = vand.u32 2147483647, %v248
      %vm305 = vcmp.eq.f32.partialorder %v304, 8.507059e+37
      %v306 = vand.u32 %v248, 2147483648
      %v307 = vor.u32 1.1754944e-38, %v306
      %v308 = vsel %vm305, %v307, %v303
      %v309 = vmul.f32 1.0, %v308
      %v310 = vrcp.pop %v249
      %v311 = vmul.f32 %v249, %v310
      %v312 = vsub.f32 1.0, %v311
      %v313 = vmul.f32 %v310, %v312
      %v314 = vadd.f32 %v310, %v313
      %vm315 = vweird.f32 %v249
      %vm316 = vweird.f32 %v310
      %vm317 = vmor %vm315, %vm316
      %v318 = vsel %vm317, %v310, %v314
      %v319 = vand.u32 2147483647, %v249
      %vm320 = vcmp.eq.f32.partialorder %v319, 8.507059e+37
      %v321 = vand.u32 %v249, 2147483648
      %v322 = vor.u32 1.1754944e-38, %v321
      %v323 = vsel %vm320, %v322, %v318
      %v324 = vmul.f32 1.0, %v323
      %vm325 = vcmask 31744
      %326 = vst.msk [vmem:[%s173] sm:$0xff] %vm325, %v264
      %327 = vst.msk [vmem:[%s173 + $0x8] sm:$0xff] %vm325, %v279
      %328 = vst.msk [vmem:[%s173 + $0x10] sm:$0xff] %vm325, %v294
      %329 = vst.msk [vmem:[%s173 + $0x18] sm:$0xff] %vm325, %v309
      %330 = vst.msk [vmem:[%s173 + $0x20] sm:$0xff] %vm325, %v324
      %s331 = smul.u32 5, %s15
      %p332 = scmp.lt.s32.totalorder %s331, 9
      %s333 = scalar_select %p332, %s331, 9
      %s334 = smul.addr %s333, 8
      %s335 = scalar_lea.vmem %s3, %s334
      // Predicated region
      $region33: #{liner_model_forward.1} parent=31 // pred_check
        %p336 = pneg %p101
      $region34: #{liner_model_forward.1} parent=31 // pred_check_branch
        %338 = sbr.rel (%p336) target = $region36
      $region35: #{liner_model_forward.1} parent=31 // pred_region
        %s339 = smul.u32 5, %s15
      $region36: #{liner_model_forward.1} parent=31 // pred_fallthru
        _
    $region32: #{liner_model_forward.1} parent=5 // pred_fallthru
      _
    %p340 = scmp.le.s32.totalorder 2, %s10
    // Predicated region
    $region37: #{liner_model_forward.1} parent=5 // pred_check
      %p341 = pneg %p340
    $region38: #{liner_model_forward.1} parent=5 // pred_check_branch
      %343 = sbr.rel (%p341) target = $region40
    $region39: #{liner_model_forward.1} parent=5 // pred_region
      %s344 = ssub.s32 %s10, 2
      // Predicated region
      $region41: #{liner_model_forward.1} parent=39 // pred_check
        %p345 = pneg %p107
      $region42: #{liner_model_forward.1} parent=39 // pred_check_branch
        %347 = sbr.rel (%p345) target = $region44
      $region43: #{liner_model_forward.1} parent=39 // pred_region
        %s348 = smul.u32 5, %s16
        %p349 = scmp.lt.s32.totalorder %s348, 9
        %s350 = scalar_select %p349, %s348, 9
        %s351 = smul.addr %s350, 8
        %s352 = scalar_lea.vmem %s3, %s351
      $region44: #{liner_model_forward.1} parent=39 // pred_fallthru
        _
    $region40: #{liner_model_forward.1} parent=5 // pred_fallthru
      _
  $region6: #{liner_model_forward.1} parent=0 // loop_footer
    %s14 = sadd.s32 1, %s10
  $region7: #{liner_model_forward.1} parent=0 // loop_footer_branch
    %9 = sbr.rel target = $region3
  $region8: #{liner_model_forward.1} parent=0 // loop_exit
    _

</llo_original>
